<compile_context>
chip_gen: v6e
topology: v6e:2x2x1
jax: 0.10.0
libtpu: 0.0.40
codegen_flags: <defaults>
</compile_context>

<pallas_src>
import jax
import jax.numpy as jnp
from jax.experimental import pallas as pl
from jax.experimental.pallas import tpu as pltpu


def normalize_kernel(params_ref, x_ref, o_ref):
    # params_ref: (rows_tile, 2) f32 -- col 0 = mean[row], col 1 = 1/std[row].
    # x_ref/o_ref: (rows_tile, lane_tile) data tiles.
    mean = params_ref[:, 0:1]       # (rows_tile, 1), lane-broadcast below
    scale = params_ref[:, 1:2]      # (rows_tile, 1)
    x = x_ref[...].astype(jnp.float32)
    o_ref[...] = ((x - mean) * scale).astype(o_ref.dtype)


def _round_up(v, m):
    return ((v + m - 1) // m) * m


def _pick_tiles(R, L, itemsize, block_bytes_cap):
    """Fixed aligned tiles; the grid uses pl.cdiv so edge blocks may be partial."""
    # Dtype-aware sublane alignment: 8 for 4-byte, 16 for 2-byte, 32 for 1-byte.
    sublane = {4: 8, 2: 16, 1: 32}.get(itemsize, 8)

    if L * sublane * itemsize <= block_bytes_cap:
        # Full-width row blocks: each DMA is one large contiguous HBM transfer.
        lane_tile = L
    else:
        lane_tile = 4096            # multiple of 128; only hit for very large H*W

    rows_fit = max(sublane,
                   (block_bytes_cap // (lane_tile * itemsize)) // sublane * sublane)
    rows_tile = min(rows_fit, _round_up(R, sublane))

    # v7x megacore: keep >= 2 iterations on the leading parallel axis when R allows.
    if rows_tile >= R and R > sublane:
        rows_tile = _round_up(pl.cdiv(R, 2), sublane)

    return rows_tile, lane_tile


def normalize(x, mean, std, *, block_bytes_cap=4 * 1024 * 1024):
    """x: (N, C, H, W); mean, std: (C,). Returns (x - mean[c]) / std[c] per channel."""
    N, C, H, W = x.shape
    R, L = N * C, H * W
    itemsize = jnp.dtype(x.dtype).itemsize

    # Lane-dense 2-D view: row r corresponds to channel r % C (free reshape of NCHW).
    x2 = x.reshape(R, L)

    # Per-row affine params, kept in f32 regardless of x dtype; exact divide once per C.
    mean_f = mean.astype(jnp.float32)
    scale_f = jnp.float32(1.0) / std.astype(jnp.float32)
    params = jnp.stack([jnp.tile(mean_f, N), jnp.tile(scale_f, N)], axis=-1)  # (R, 2)

    rows_tile, lane_tile = _pick_tiles(R, L, itemsize, block_bytes_cap)
    grid = (pl.cdiv(R, rows_tile), pl.cdiv(L, lane_tile))

    # VMEM budget from actual block bytes (double-buffered x + out, lane-padded params),
    # clamped to 40 MiB so it always fits v7x's 64 MiB physical VMEM.
    x_block_bytes = rows_tile * lane_tile * itemsize
    param_block_bytes = rows_tile * 128 * 4     # (rows_tile, 2) pads to 128 lanes
    needed = 4 * x_block_bytes + 2 * param_block_bytes + (2 << 20)
    vmem_limit = int(min(max(needed, 8 << 20), 40 << 20))

    out2 = pl.pallas_call(
        normalize_kernel,
        out_shape=jax.ShapeDtypeStruct((R, L), x.dtype),
        grid_spec=pltpu.PrefetchScalarGridSpec(
            num_scalar_prefetch=0,
            grid=grid,
            in_specs=[
                pl.BlockSpec((rows_tile, 2), lambda i, j: (i, 0)),           # mean | 1/std
                pl.BlockSpec((rows_tile, lane_tile), lambda i, j: (i, j)),   # x tile
            ],
            out_specs=pl.BlockSpec((rows_tile, lane_tile), lambda i, j: (i, j)),
        ),
        compiler_params=pltpu.CompilerParams(
            dimension_semantics=("parallel", "parallel"),
            vmem_limit_bytes=vmem_limit,
        ),
    )(params, x2)

    return out2.reshape(N, C, H, W)


if __name__ == "__main__":
    key = jax.random.PRNGKey(0)

    # Per-channel parameters (the module's __init__ takes per-channel mean/std).
    mean = jnp.array([0.485, 0.456, 0.406], dtype=jnp.float32)
    std = jnp.array([0.229, 0.224, 0.225], dtype=jnp.float32)

    # Case 1: small image-normalizer shape, lane dim a multiple of 128.
    N, C, H, W = 2, 3, 16, 16
    x = jax.random.normal(key, (N, C, H, W), dtype=jnp.float32)
    out = jax.block_until_ready(normalize(x, mean, std))
    ref = (x - mean[None, :, None, None]) / std[None, :, None, None]
    assert out.shape == x.shape and out.dtype == x.dtype
    assert jnp.allclose(out, ref, atol=1e-6, rtol=1e-6)

    # Case 2: awkward shape (rows not a multiple of 8, lanes not a multiple of 128)
    # to exercise the cdiv / partial-edge-block path.
    x2 = jax.random.normal(jax.random.PRNGKey(1), (2, 3, 7, 9), dtype=jnp.float32)
    out2 = jax.block_until_ready(normalize(x2, mean, std))
    ref2 = (x2 - mean[None, :, None, None]) / std[None, :, None, None]
    assert jnp.allclose(out2, ref2, atol=1e-6, rtol=1e-6)

    print("KERNEL_OK")
</pallas_src>

<mosaic_0001>
module attributes {stable_mosaic.version = 11 : i64} {
  func.func @normalize_kernel(%arg0: i32, %arg1: i32, %arg2: memref<8x2xf32, #tpu.memory_space<vmem>>, %arg3: memref<8x256xf32, #tpu.memory_space<vmem>>, %arg4: memref<8x256xf32, #tpu.memory_space<vmem>>) attributes {dimension_semantics = [#tpu.dimension_semantics<parallel>, #tpu.dimension_semantics<parallel>], iteration_bounds = array<i64: 1, 1>, scalar_prefetch = 0 : i64, scratch_operands = 0 : i64, tpu.core_type = #tpu.core_type<tc>, window_params = [{transform_indices = @transform_0, window_bounds = array<i64: 8, 2>}, {transform_indices = @transform_1, window_bounds = array<i64: 8, 256>}, {transform_indices = @transform_2, window_bounds = array<i64: 8, 256>}]} {
    %c0 = arith.constant 0 : index
    %c0_0 = arith.constant 0 : index
    %0 = vector.load %arg2[%c0, %c0_0] : memref<8x2xf32, #tpu.memory_space<vmem>>, vector<8x1xf32>
    %c0_1 = arith.constant 0 : index
    %c1 = arith.constant 1 : index
    %1 = vector.load %arg2[%c0_1, %c1] : memref<8x2xf32, #tpu.memory_space<vmem>>, vector<8x1xf32>
    %c0_2 = arith.constant 0 : index
    %c0_3 = arith.constant 0 : index
    %2 = vector.load %arg3[%c0_2, %c0_3] : memref<8x256xf32, #tpu.memory_space<vmem>>, vector<8x256xf32>
    %3 = vector.broadcast %0 : vector<8x1xf32> to vector<8x256xf32>
    %4 = arith.subf %2, %3 : vector<8x256xf32>
    %5 = vector.broadcast %1 : vector<8x1xf32> to vector<8x256xf32>
    %6 = arith.mulf %4, %5 : vector<8x256xf32>
    %c0_4 = arith.constant 0 : index
    %c0_5 = arith.constant 0 : index
    %7 = vector.load %arg4[%c0_4, %c0_5] : memref<8x256xf32, #tpu.memory_space<vmem>>, vector<8x256xf32>
    tpu.vector_store %arg4[%c0_4, %c0_5], %6 {strides = array<i32>} : memref<8x256xf32, #tpu.memory_space<vmem>>, vector<8x256xf32>,
    return
  }
  func.func @transform_0(%arg0: i32, %arg1: i32) -> (i32, i32) {
    %c0_i32 = arith.constant 0 : i32
    %c0_i32_0 = arith.constant 0 : i32
    return %arg0, %c0_i32 : i32, i32
  }
  func.func @transform_1(%arg0: i32, %arg1: i32) -> (i32, i32) {
    %c0_i32 = arith.constant 0 : i32
    return %arg0, %arg1 : i32, i32
  }
  func.func @transform_2(%arg0: i32, %arg1: i32) -> (i32, i32) {
    %c0_i32 = arith.constant 0 : i32
    return %arg0, %arg1 : i32, i32
  }
}

</mosaic_0001>

<llo_original>
// kernel: tpu_custom_call.1
$region0: #{tpu_custom_call.1}
  #allocation0 [shape = 'u32[]', space=smem, size = 0x4, offset = 0x4, fixed_abs, tag = 'smem constant byte address 0x4 - core index']
  #allocation1 [shape = 'u32[144,128]{1,0:T(1,128)}', space=vmem, size = 0x12000, scoped, tag = 'internal scratch']
  %s0 = inlined_call_operand.vmem [shape: f32[6,2], index: 0, kind: input, shape index: {}]
  %s1 = inlined_call_operand.hbm [shape: f32[6,256], index: 1, kind: input, shape index: {}]
  %s2 = inlined_call_operand.hbm [shape: f32[6,256], index: 2, kind: output, shape index: {}]
  %s3 = sld [smem:[#allocation0]]
  $region22: #{tpu_custom_call.1} parent=0
    _
  %s5 = ssub.s32 1, %s3
  %s6 = scalar_select 0, %s5, %s3
  $region1: #{tpu_custom_call.1} parent=0
    #allocation2 [shape = 'u8[8192]{0}', space=vmem, size = 0x2000, scoped, tag = 'input window, operand 1, single buffered']
    #allocation3 [shape = 's32[1]{0}', space=sflag, size = 0x4, scoped, tag = 'scoped memory for tpu_custom_call.1']
    #allocation4 [shape = 's32[1]{0}', space=sflag, size = 0x4, scoped, tag = 'scoped memory for tpu_custom_call.1']
    #allocation5 [shape = 'u8[8192]{0}', space=vmem, size = 0x2000, scoped, tag = 'output window, operand 0, single buffered']
    %7 = vsyncpa [#allocation3], 0
    %8 = vsyncpa [#allocation4], 0
    // Predicated region
    $region2: #{tpu_custom_call.1} parent=1 // pred_check
      _
    $region3: #{tpu_custom_call.1} parent=1 // pred_check_branch
      %10 = sbr.rel (0) target = $region5
    $region4: #{tpu_custom_call.1} parent=1 // pred_region
      _
    $region5: #{tpu_custom_call.1} parent=1 // pred_fallthru
      _
    // Predicated region
    $region6: #{tpu_custom_call.1} parent=1 // pred_check
      _
    $region7: #{tpu_custom_call.1} parent=1 // pred_check_branch
      %12 = sbr.rel (0) target = $region9
    $region8: #{tpu_custom_call.1} parent=1 // pred_region
      %s14 = ssub.s32 256, 256
      %15 = vsyncadd [#allocation3], %s14
      %s17 = sshll.u32 [#allocation2], 4
      %s18 = int_to_ptr.vmem [resolvable:$true] %s17
      %20 = dma.hbm_to_vmem [thread:$0]  %s1, 256, %s18, [#allocation3]
    $region9: #{tpu_custom_call.1} parent=1 // pred_fallthru
      _
    // Predicated region
    $region10: #{tpu_custom_call.1} parent=1 // pred_check
      _
    $region11: #{tpu_custom_call.1} parent=1 // pred_check_branch
      %22 = sbr.rel (0) target = $region13
    $region12: #{tpu_custom_call.1} parent=1 // pred_region
      %23 = dma.done [#allocation3], 256
    $region13: #{tpu_custom_call.1} parent=1 // pred_fallthru
      _
    %v24 = vld [vmem:[%s0] sm:$0xff]
    %v25 = vld [vmem:[#allocation2] sm:$0xff]
    %v26 = vld [vmem:[#allocation2 + $0x8] sm:$0xff]
    %28 = vset.pattern.permute.xlu0 0
    %29 = vperm.xlu0 %28, %v24
    %v30 = vpop.permute.xlu0 %29
    %v32 = vsub.f32 %v25, %v30
    %v33 = vsub.f32 %v26, %v30
    %34 = vset.pattern.permute.xlu0 1
    %35 = vperm.xlu0 %34, %v24
    %v36 = vpop.permute.xlu0 %35
    %v38 = vmul.f32 %v32, %v36
    %v39 = vmul.f32 %v33, %v36
    %40 = vst [vmem:[#allocation5] sm:$0xff] %v38
    %41 = vst [vmem:[#allocation5 + $0x8] sm:$0xff] %v39
    // Predicated region
    $region14: #{tpu_custom_call.1} parent=1 // pred_check
      _
    $region15: #{tpu_custom_call.1} parent=1 // pred_check_branch
      %43 = sbr.rel (0) target = $region17
    $region16: #{tpu_custom_call.1} parent=1 // pred_region
      %s45 = ssub.s32 256, 256
      %46 = vsyncadd [#allocation4], %s45
      %s48 = sshll.u32 [#allocation5], 4
      %s49 = int_to_ptr.vmem [resolvable:$true] %s48
      %51 = dma.vmem_to_hbm [thread:$0]  %s49, 256, %s2, [#allocation4]
    $region17: #{tpu_custom_call.1} parent=1 // pred_fallthru
      _
    // Predicated region
    $region18: #{tpu_custom_call.1} parent=1 // pred_check
      _
    $region19: #{tpu_custom_call.1} parent=1 // pred_check_branch
      %53 = sbr.rel (0) target = $region21
    $region20: #{tpu_custom_call.1} parent=1 // pred_region
      %54 = dma.done [#allocation4], 256
    $region21: #{tpu_custom_call.1} parent=1 // pred_fallthru
      _
    %55 = vsyncpa [#allocation3], 1
    %56 = vsyncpa [#allocation4], 1

</llo_original>
